<compile_context>
chip_gen: v7x
topology: tpu7x:2x2x1
jax: 0.10.0
libtpu: 0.0.40
codegen_flags: <defaults>
</compile_context>

<pallas_src>
import functools

import jax
import jax.numpy as jnp
from jax.experimental import pallas as pl
from jax.experimental.pallas import tpu as pltpu


def _round_up(n, m):
    return ((n + m - 1) // m) * m


# Row layout of the packed "vector" slab (shape (_V_ROWS, H)):
_ROW_SIN, _ROW_COS, _ROW_B1, _ROW_B2, _ROW_B3 = 0, 1, 2, 3, 4
_ROW_W4_0, _ROW_W4_1, _ROW_B4, _ROW_Y0 = 5, 6, 7, 8
_V_ROWS = 16  # padded to a sublane multiple


def pinn_kernel(x_ref, w_ref, v_ref, o_ref, *, hidden):
    H = hidden
    t = x_ref[...]                                   # (TN, 1)
    v = v_ref[...]                                   # (_V_ROWS, H) tiny load

    sc = v[_ROW_SIN:_ROW_SIN + 1, :]                 # (1, H) sine coeffs (0 past F)
    cc = v[_ROW_COS:_ROW_COS + 1, :]                 # (1, H) cosine coeffs
    b1 = v[_ROW_B1:_ROW_B1 + 1, :]
    b2 = v[_ROW_B2:_ROW_B2 + 1, :]
    b3 = v[_ROW_B3:_ROW_B3 + 1, :]
    w4c0 = v[_ROW_W4_0:_ROW_W4_0 + 1, :]             # (1, H) = w4[:, 0]
    w4c1 = v[_ROW_W4_1:_ROW_W4_1 + 1, :]             # (1, H) = w4[:, 1]
    b4 = v[_ROW_B4:_ROW_B4 + 1, 0:2]                 # (1, 2)
    y0 = v[_ROW_Y0:_ROW_Y0 + 1, 0:2]                 # (1, 2)

    # Fourier features on the VPU: (TN,1)*(1,H) broadcast, no MXU.
    # Lanes >= num_features multiply zero weight rows in w1, so padding is exact
    # (sin(0)=0 and cos(0)=1 both hit zero rows).
    sin_f = jnp.sin(t * sc)                          # (TN, H)
    cos_f = jnp.cos(t * cc)                          # (TN, H)

    # Weight slab: [w1_sin_pad | w1_cos_pad | w2 | w3], each an (H, H) block.
    w1s = w_ref[0 * H:1 * H, :]
    w1c = w_ref[1 * H:2 * H, :]
    w2 = w_ref[2 * H:3 * H, :]
    w3 = w_ref[3 * H:4 * H, :]

    h = jnp.tanh(jnp.dot(sin_f, w1s, preferred_element_type=jnp.float32)
                 + jnp.dot(cos_f, w1c, preferred_element_type=jnp.float32)
                 + b1)
    h = jnp.tanh(jnp.dot(h, w2, preferred_element_type=jnp.float32) + b2)
    h = jnp.tanh(jnp.dot(h, w3, preferred_element_type=jnp.float32) + b3)

    # Final (H -> 2) layer as VPU multiply + lane reduce (keeps the MXU free).
    o0 = jnp.sum(h * w4c0, axis=-1, keepdims=True)   # (TN, 1)
    o1 = jnp.sum(h * w4c1, axis=-1, keepdims=True)   # (TN, 1)
    lane = jax.lax.broadcasted_iota(jnp.int32, (t.shape[0], 2), 1)
    out = jnp.where(lane == 0, o0, o1) + b4          # (TN, 2)

    # scaled = y0 + tanh(x) * [1, 1] * out  ([1,1] multiplier is identity)
    o_ref[...] = y0 + jnp.tanh(t) * out
    # TODO(synk): output stays (N, 2) (2/128 live lanes); at very large N a
    # lane-transposed (2, N) layout would make stores lane-dense.


def pack_params(p, *, hidden, num_features):
    """Pack the 13 small parameter tensors into two contiguous f32 slabs."""
    H, F = hidden, num_features
    assert F <= H and H % 8 == 0, "packing assumes F <= H and H % 8 == 0"

    slab_w = jnp.zeros((4 * H, H), jnp.float32)
    slab_w = slab_w.at[0 * H:0 * H + F, :].set(p["w1_sin"])   # rows F..H stay zero
    slab_w = slab_w.at[1 * H:1 * H + F, :].set(p["w1_cos"])
    slab_w = slab_w.at[2 * H:3 * H, :].set(p["w2"])
    slab_w = slab_w.at[3 * H:4 * H, :].set(p["w3"])

    slab_v = jnp.zeros((_V_ROWS, H), jnp.float32)
    slab_v = slab_v.at[_ROW_SIN, 0:F].set(p["sine_coeff"][:, 0])
    slab_v = slab_v.at[_ROW_COS, 0:F].set(p["cosine_coeff"][:, 0])
    slab_v = slab_v.at[_ROW_B1, :].set(p["b1"])
    slab_v = slab_v.at[_ROW_B2, :].set(p["b2"])
    slab_v = slab_v.at[_ROW_B3, :].set(p["b3"])
    slab_v = slab_v.at[_ROW_W4_0, :].set(p["w4"][:, 0])
    slab_v = slab_v.at[_ROW_W4_1, :].set(p["w4"][:, 1])
    slab_v = slab_v.at[_ROW_B4, 0:2].set(p["b4"])
    slab_v = slab_v.at[_ROW_Y0, 0:2].set(p["y0"])
    return slab_w, slab_v


def pinn_forward(x, slab_w, slab_v, *, hidden, block_n=128):
    """x: (N, 1) float32 time points.  Returns (N, 2)."""
    N = x.shape[0]
    H = hidden

    # Batch tile: multiple of 8 sublanes, capped by block_n (well within VMEM
    # even on v7x's 64 MiB: ~TN*(H+3)*4 B of live data per block).
    TN = min(block_n, _round_up(N, 8))
    n_pad = _round_up(N, TN)
    if n_pad != N:
        x = jnp.pad(x, ((0, n_pad - N), (0, 0)))
    grid = (n_pad // TN,)

    kernel = functools.partial(pinn_kernel, hidden=H)

    cost = pl.CostEstimate(
        flops=int(n_pad * (8 * H * H + 4 * H)),
        transcendentals=int(n_pad * (5 * H + 1)),
        bytes_accessed=int(n_pad * 4 * (1 + 2)
                           + slab_w.size * 4 + slab_v.size * 4),
    )

    out = pl.pallas_call(
        kernel,
        out_shape=jax.ShapeDtypeStruct((n_pad, 2), jnp.float32),
        grid=grid,
        in_specs=[
            pl.BlockSpec((TN, 1), lambda i: (i, 0)),            # x: tiled on rows
            pl.BlockSpec(slab_w.shape, lambda i: (0, 0)),        # weights: resident
            pl.BlockSpec(slab_v.shape, lambda i: (0, 0)),        # vectors: resident
        ],
        out_specs=pl.BlockSpec((TN, 2), lambda i: (i, 0)),
        compiler_params=pltpu.CompilerParams(
            dimension_semantics=("parallel",)),                  # 2 TCs on v7x
        cost_estimate=cost,
    )(x, slab_w, slab_v)
    return out[:N]


def init_params(key, num_features, hidden_units):
    """Deterministic synthetic parameters with the PyTorch module's shapes
    (Linear weights stored transposed: (in, out))."""
    ks = jax.random.split(key, 10)
    F, H = num_features, hidden_units

    def uinit(k, shape, fan_in):
        bound = 1.0 / jnp.sqrt(fan_in)
        return jax.random.uniform(k, shape, jnp.float32, -bound, bound)

    sine_coeff = jax.random.normal(ks[0], (F, 1), jnp.float32)   # torch.normal(0,1)
    cosine_coeff = jax.random.normal(ks[1], (F, 1), jnp.float32)
    w1 = uinit(ks[2], (2 * F, H), 2 * F)      # layer1.weight.T
    b1 = uinit(ks[3], (H,), 2 * F)
    w2 = uinit(ks[4], (H, H), H)
    b2 = uinit(ks[5], (H,), H)
    w3 = uinit(ks[6], (H, H), H)
    b3 = uinit(ks[7], (H,), H)
    w4 = uinit(ks[8], (H, 2), H)
    b4 = uinit(ks[9], (2,), H)
    y0 = jnp.asarray([0.1, 0.5], jnp.float32)  # initial condition

    return {"sine_coeff": sine_coeff, "cosine_coeff": cosine_coeff,
            "w1_sin": w1[:F], "w1_cos": w1[F:], "b1": b1,
            "w2": w2, "b2": b2, "w3": w3, "b3": b3,
            "w4": w4, "b4": b4, "y0": y0}


def reference_forward(x, p):
    """Pure-JAX reference identical to the PyTorch forward."""
    sin_f = jnp.sin(x @ p["sine_coeff"].T)
    cos_f = jnp.cos(x @ p["cosine_coeff"].T)
    h = jnp.tanh(sin_f @ p["w1_sin"] + cos_f @ p["w1_cos"] + p["b1"])
    h = jnp.tanh(h @ p["w2"] + p["b2"])
    h = jnp.tanh(h @ p["w3"] + p["b3"])
    out = h @ p["w4"] + p["b4"]
    return p["y0"] + jnp.tanh(x) * jnp.array([1.0, 1.0]) * out


if __name__ == "__main__":
    key = jax.random.PRNGKey(0)
    k_param, k_x, k_x2 = jax.random.split(key, 3)

    num_features = 4
    hidden_units = 32

    params = init_params(k_param, num_features, hidden_units)
    slab_w, slab_v = pack_params(params, hidden=hidden_units,
                                 num_features=num_features)

    # Small batch (single grid step).
    N = 16
    x = jax.random.uniform(k_x, (N, 1), jnp.float32, 0.0, 10.0)
    y = pinn_forward(x, slab_w, slab_v, hidden=hidden_units)
    y = jax.block_until_ready(y)
    y_ref = reference_forward(x, params)
    assert y.shape == (N, 2)
    assert jnp.allclose(y, y_ref, atol=1e-5, rtol=1e-5), "mismatch (N=16)"

    # Larger batch to exercise the parallel grid + padding path.
    N2 = 200
    x2 = jax.random.uniform(k_x2, (N2, 1), jnp.float32, 0.0, 10.0)
    y2 = pinn_forward(x2, slab_w, slab_v, hidden=hidden_units)
    y2 = jax.block_until_ready(y2)
    y2_ref = reference_forward(x2, params)
    assert y2.shape == (N2, 2)
    assert jnp.allclose(y2, y2_ref, atol=1e-5, rtol=1e-5), "mismatch (N=200)"

    print("KERNEL_OK")
</pallas_src>

<mosaic_0001>
module attributes {stable_mosaic.version = 11 : i64} {
  func.func @pinn_kernel(%arg0: i32, %arg1: memref<16x1xf32, #tpu.memory_space<vmem>>, %arg2: memref<128x32xf32, #tpu.memory_space<vmem>>, %arg3: memref<16x32xf32, #tpu.memory_space<vmem>>, %arg4: memref<16x2xf32, #tpu.memory_space<vmem>>) attributes {dimension_semantics = [#tpu.dimension_semantics<parallel>], iteration_bounds = array<i64: 1>, scalar_prefetch = 0 : i64, scratch_operands = 0 : i64, tpu.core_type = #tpu.core_type<tc>, window_params = [{transform_indices = @transform_0, window_bounds = array<i64: 16, 1>}, {pipeline_mode = #tpu.pipeline_mode<synchronous>, transform_indices = @transform_1, window_bounds = array<i64: 128, 32>}, {pipeline_mode = #tpu.pipeline_mode<synchronous>, transform_indices = @transform_2, window_bounds = array<i64: 16, 32>}, {transform_indices = @transform_3, window_bounds = array<i64: 16, 2>}]} {
    %c0 = arith.constant 0 : index
    %c0_0 = arith.constant 0 : index
    %0 = vector.load %arg1[%c0, %c0_0] : memref<16x1xf32, #tpu.memory_space<vmem>>, vector<16x1xf32>
    %c0_1 = arith.constant 0 : index
    %c0_2 = arith.constant 0 : index
    %1 = vector.load %arg3[%c0_1, %c0_2] : memref<16x32xf32, #tpu.memory_space<vmem>>, vector<16x32xf32>
    %2 = vector.extract_strided_slice %1 {offsets = [0, 0], sizes = [1, 32], strides = [1, 1]} : vector<16x32xf32> to vector<1x32xf32>
    %3 = vector.extract_strided_slice %1 {offsets = [1, 0], sizes = [1, 32], strides = [1, 1]} : vector<16x32xf32> to vector<1x32xf32>
    %4 = vector.extract_strided_slice %1 {offsets = [2, 0], sizes = [1, 32], strides = [1, 1]} : vector<16x32xf32> to vector<1x32xf32>
    %5 = vector.extract_strided_slice %1 {offsets = [3, 0], sizes = [1, 32], strides = [1, 1]} : vector<16x32xf32> to vector<1x32xf32>
    %6 = vector.extract_strided_slice %1 {offsets = [4, 0], sizes = [1, 32], strides = [1, 1]} : vector<16x32xf32> to vector<1x32xf32>
    %7 = vector.extract_strided_slice %1 {offsets = [5, 0], sizes = [1, 32], strides = [1, 1]} : vector<16x32xf32> to vector<1x32xf32>
    %8 = vector.extract_strided_slice %1 {offsets = [6, 0], sizes = [1, 32], strides = [1, 1]} : vector<16x32xf32> to vector<1x32xf32>
    %9 = vector.extract_strided_slice %1 {offsets = [7, 0], sizes = [1, 2], strides = [1, 1]} : vector<16x32xf32> to vector<1x2xf32>
    %10 = vector.extract_strided_slice %1 {offsets = [8, 0], sizes = [1, 2], strides = [1, 1]} : vector<16x32xf32> to vector<1x2xf32>
    %11 = vector.broadcast %0 : vector<16x1xf32> to vector<16x32xf32>
    %12 = vector.broadcast %2 : vector<1x32xf32> to vector<16x32xf32>
    %13 = arith.mulf %11, %12 : vector<16x32xf32>
    %14 = math.sin %13 : vector<16x32xf32>
    %15 = vector.broadcast %0 : vector<16x1xf32> to vector<16x32xf32>
    %16 = vector.broadcast %3 : vector<1x32xf32> to vector<16x32xf32>
    %17 = arith.mulf %15, %16 : vector<16x32xf32>
    %18 = math.cos %17 : vector<16x32xf32>
    %c0_3 = arith.constant 0 : index
    %c0_4 = arith.constant 0 : index
    %19 = vector.load %arg2[%c0_3, %c0_4] : memref<128x32xf32, #tpu.memory_space<vmem>>, vector<32x32xf32>
    %c32 = arith.constant 32 : index
    %c0_5 = arith.constant 0 : index
    %20 = vector.load %arg2[%c32, %c0_5] : memref<128x32xf32, #tpu.memory_space<vmem>>, vector<32x32xf32>
    %c64 = arith.constant 64 : index
    %c0_6 = arith.constant 0 : index
    %21 = vector.load %arg2[%c64, %c0_6] : memref<128x32xf32, #tpu.memory_space<vmem>>, vector<32x32xf32>
    %c96 = arith.constant 96 : index
    %c0_7 = arith.constant 0 : index
    %22 = vector.load %arg2[%c96, %c0_7] : memref<128x32xf32, #tpu.memory_space<vmem>>, vector<32x32xf32>
    %cst = arith.constant dense<0.000000e+00> : vector<16x32xf32>
    %23 = tpu.matmul %14, %19, %cst {dimension_numbers = #tpu.dot_dimension_numbers<[1], [0], [0], [1], [0, 0, 1, 1], [], []>} : vector<16x32xf32>, vector<32x32xf32>, vector<16x32xf32> -> vector<16x32xf32>
    %cst_8 = arith.constant dense<0.000000e+00> : vector<16x32xf32>
    %24 = tpu.matmul %18, %20, %cst_8 {dimension_numbers = #tpu.dot_dimension_numbers<[1], [0], [0], [1], [0, 0, 1, 1], [], []>} : vector<16x32xf32>, vector<32x32xf32>, vector<16x32xf32> -> vector<16x32xf32>
    %25 = arith.addf %23, %24 : vector<16x32xf32>
    %26 = vector.broadcast %4 : vector<1x32xf32> to vector<16x32xf32>
    %27 = arith.addf %25, %26 : vector<16x32xf32>
    %28 = math.tanh %27 : vector<16x32xf32>
    %cst_9 = arith.constant dense<0.000000e+00> : vector<16x32xf32>
    %29 = tpu.matmul %28, %21, %cst_9 {dimension_numbers = #tpu.dot_dimension_numbers<[1], [0], [0], [1], [0, 0, 1, 1], [], []>} : vector<16x32xf32>, vector<32x32xf32>, vector<16x32xf32> -> vector<16x32xf32>
    %30 = vector.broadcast %5 : vector<1x32xf32> to vector<16x32xf32>
    %31 = arith.addf %29, %30 : vector<16x32xf32>
    %32 = math.tanh %31 : vector<16x32xf32>
    %cst_10 = arith.constant dense<0.000000e+00> : vector<16x32xf32>
    %33 = tpu.matmul %32, %22, %cst_10 {dimension_numbers = #tpu.dot_dimension_numbers<[1], [0], [0], [1], [0, 0, 1, 1], [], []>} : vector<16x32xf32>, vector<32x32xf32>, vector<16x32xf32> -> vector<16x32xf32>
    %34 = vector.broadcast %6 : vector<1x32xf32> to vector<16x32xf32>
    %35 = arith.addf %33, %34 : vector<16x32xf32>
    %36 = math.tanh %35 : vector<16x32xf32>
    %37 = vector.broadcast %7 : vector<1x32xf32> to vector<16x32xf32>
    %38 = arith.mulf %36, %37 : vector<16x32xf32>
    %cst_11 = arith.constant dense<0.000000e+00> : vector<16xf32>
    %39 = vector.multi_reduction <add>, %38, %cst_11 [1] : vector<16x32xf32> to vector<16xf32>
    %40 = vector.shape_cast %39 : vector<16xf32> to vector<16x1xf32>
    %41 = vector.broadcast %8 : vector<1x32xf32> to vector<16x32xf32>
    %42 = arith.mulf %36, %41 : vector<16x32xf32>
    %cst_12 = arith.constant dense<0.000000e+00> : vector<16xf32>
    %43 = vector.multi_reduction <add>, %42, %cst_12 [1] : vector<16x32xf32> to vector<16xf32>
    %44 = vector.shape_cast %43 : vector<16xf32> to vector<16x1xf32>
    %45 = tpu.iota {dimensions = array<i32: 1>} : vector<16x2xi32>
    %c0_i32 = arith.constant 0 : i32
    %46 = vector.broadcast %c0_i32 : i32 to vector<16x2xi32>
    %47 = arith.cmpi eq, %45, %46 : vector<16x2xi32>
    %48 = vector.shape_cast %40 : vector<16x1xf32> to vector<16x1xf32>
    %49 = vector.broadcast %48 : vector<16x1xf32> to vector<16x2xf32>
    %50 = vector.shape_cast %44 : vector<16x1xf32> to vector<16x1xf32>
    %51 = vector.broadcast %50 : vector<16x1xf32> to vector<16x2xf32>
    %52 = arith.select %47, %49, %51 : vector<16x2xi1>, vector<16x2xf32>
    %53 = vector.broadcast %9 : vector<1x2xf32> to vector<16x2xf32>
    %54 = arith.addf %52, %53 : vector<16x2xf32>
    %55 = math.tanh %0 : vector<16x1xf32>
    %56 = vector.broadcast %55 : vector<16x1xf32> to vector<16x2xf32>
    %57 = arith.mulf %56, %54 : vector<16x2xf32>
    %58 = vector.broadcast %10 : vector<1x2xf32> to vector<16x2xf32>
    %59 = arith.addf %58, %57 : vector<16x2xf32>
    %c0_13 = arith.constant 0 : index
    %c0_14 = arith.constant 0 : index
    %60 = vector.load %arg4[%c0_13, %c0_14] : memref<16x2xf32, #tpu.memory_space<vmem>>, vector<16x2xf32>
    tpu.vector_store %arg4[%c0_13, %c0_14], %59 {strides = array<i32>} : memref<16x2xf32, #tpu.memory_space<vmem>>, vector<16x2xf32>,
    return
  }
  func.func @transform_0(%arg0: i32) -> (i32, i32) {
    %c0_i32 = arith.constant 0 : i32
    %c0_i32_0 = arith.constant 0 : i32
    return %arg0, %c0_i32 : i32, i32
  }
  func.func @transform_1(%arg0: i32) -> (i32, i32) {
    %c0_i32 = arith.constant 0 : i32
    %c0_i32_0 = arith.constant 0 : i32
    %c0_i32_1 = arith.constant 0 : i32
    return %c0_i32, %c0_i32_0 : i32, i32
  }
  func.func @transform_2(%arg0: i32) -> (i32, i32) {
    %c0_i32 = arith.constant 0 : i32
    %c0_i32_0 = arith.constant 0 : i32
    %c0_i32_1 = arith.constant 0 : i32
    return %c0_i32, %c0_i32_0 : i32, i32
  }
  func.func @transform_3(%arg0: i32) -> (i32, i32) {
    %c0_i32 = arith.constant 0 : i32
    %c0_i32_0 = arith.constant 0 : i32
    return %arg0, %c0_i32 : i32, i32
  }
}

</mosaic_0001>

<llo_original>
// kernel: tpu_custom_call.1
$region0: #{tpu_custom_call.1}
  #allocation0 [shape = 'u32[]', space=smem, size = 0x4, offset = 0x4, fixed_abs, tag = 'smem constant byte address 0x4 - core index']
  #allocation1 [shape = 'u32[144,128]{1,0:T(1,128)}', space=vmem, size = 0x12000, scoped, tag = 'internal scratch']
  %s0 = inlined_call_operand.vmem [shape: f32[16,1], index: 0, kind: input, shape index: {}]
  %s1 = inlined_call_operand.vmem [shape: f32[128,32], index: 1, kind: input, shape index: {}]
  %s2 = inlined_call_operand.vmem [shape: f32[16,32], index: 2, kind: input, shape index: {}]
  %s3 = inlined_call_operand.vmem [shape: f32[16,2], index: 3, kind: output, shape index: {}]
  %s4 = sld [smem:[#allocation0]]
  $region22: #{tpu_custom_call.1} parent=0
    _
  %s6 = ssub.s32 1, %s4
  %s7 = scalar_select 0, %s6, %s4
  // Predicated region
  $region2: #{tpu_custom_call.1} parent=0 // pred_check
    _
  $region3: #{tpu_custom_call.1} parent=0 // pred_check_branch
    %9 = sbr.rel (0) target = $region5
  $region4: #{tpu_custom_call.1} parent=0 // pred_region
    _
  $region5: #{tpu_custom_call.1} parent=0 // pred_fallthru
    _
  // Predicated region
  $region6: #{tpu_custom_call.1} parent=0 // pred_check
    _
  $region7: #{tpu_custom_call.1} parent=0 // pred_check_branch
    %11 = sbr.rel (0) target = $region9
  $region8: #{tpu_custom_call.1} parent=0 // pred_region
    _
  $region9: #{tpu_custom_call.1} parent=0 // pred_fallthru
    _
  // Predicated region
  $region10: #{tpu_custom_call.1} parent=0 // pred_check
    _
  $region11: #{tpu_custom_call.1} parent=0 // pred_check_branch
    %13 = sbr.rel (0) target = $region13
  $region12: #{tpu_custom_call.1} parent=0 // pred_region
    _
  $region13: #{tpu_custom_call.1} parent=0 // pred_fallthru
    _
  %v14 = vld [vmem:[%s0] sm:$0xff]
  %v15 = vld [vmem:[%s0 + $0x8] sm:$0xff]
  %v16 = vld [vmem:[%s2] sm:$0xff]
  %v17 = vld [vmem:[%s2 + $0x8] sm:$0xff]
  %19 = vset.pattern.permute.xlu0 0
  %20 = vperm.xlu0 %19, %v14
  %v21 = vpop.permute.xlu0 %20
  %24 = vset.pattern.permute.xlu0 0
  %25 = vperm.xlu0 %24, %v15
  %v26 = vpop.permute.xlu0 %25
  %v28 = vlaneseq
  %v29 = vshrl.u32 %v28, 7
  %v30 = vsub.s32 0, %v29
  %v31 = vrot.slane %v16, %v30
  %v32 = vmul.f32 %v21, %v31
  %v33 = vmul.f32 %v26, %v31
  %v34 = vand.u32 2147483647, %v32
  %vm35 = vcmp.le.f32.partialorder %v34, 0.7853982
  %vm36 = vcmp.lt.s32.totalorder %v32, 0
  %v37 = vand.u32 %v32, 2139095040
  %v38 = vshrl.u32 %v37, 23
  %v39 = vsub.s32 %v38, 127
  %v40 = vand.u32 2147483647, %v32
  %v41 = vand.u32 %v40, 8388607
  %v42 = vor.u32 %v41, 8388608
  %v43 = vsub.s32 0, %v42
  %v44 = vadd.s32 %v39, 1
  %vm45 = vcmp.gt.s32.totalorder %v44, 0
  %v46 = vsel %vm45, %v44, 0
  %v47 = vshrl.u32 %v46, 5
  %v48 = vand.u32 %v46, 31
  %v49 = vsub.s32 32, %v48
  %v50 = vshrl.u32 683565275, %v49
  %v51 = vshll.u32 683565275, %v48
  %v52 = vshrl.u32 2475754826, %v49
  %v53 = vor.u32 %v51, %v52
  %v54 = vshll.u32 2475754826, %v48
  %v55 = vshrl.u32 2131351028, %v49
  %v56 = vor.u32 %v54, %v55
  %v57 = vshll.u32 2131351028, %v48
  %v58 = vshrl.u32 2102212464, %v49
  %v59 = vor.u32 %v57, %v58
  %v60 = vshll.u32 2102212464, %v48
  %v61 = vshrl.u32 920167782, %v49
  %v62 = vor.u32 %v60, %v61
  %v63 = vshll.u32 920167782, %v48
  %v64 = vshrl.u32 1326507024, %v49
  %v65 = vor.u32 %v63, %v64
  %vm66 = vcmp.lt.s32.totalorder %v47, 1
  %vm67 = vcmp.lt.s32.totalorder %v47, 2
  %vm68 = vcmp.lt.s32.totalorder %v47, 3
  %vm69 = vcmp.lt.s32.totalorder %v47, 4
  %v70 = vsel %vm66, %v50, %v53
  %v71 = vsel %vm69, %v59, 2102212464
  %v72 = vsel %vm68, %v56, %v71
  %v73 = vsel %vm67, %v70, %v72
  %v74 = vsel %vm66, %v53, %v56
  %v75 = vsel %vm69, %v62, 920167782
  %v76 = vsel %vm68, %v59, %v75
  %v77 = vsel %vm67, %v74, %v76
  %v78 = vsel %vm66, %v56, %v59
  %v79 = vsel %vm69, %v65, 1326507024
  %v80 = vsel %vm68, %v62, %v79
  %v81 = vsel %vm67, %v78, %v80
  %v82 = vshll.u32 %v42, 8
  %v83 = vmul.u32.u64.compose %v82, %v81
  %v84 = vextract.low.u32 %v83
  %v85 = vextract.high.u32 %v83
  %v86 = vmul.u32.u64.compose %v82, %v77
  %v87 = vextract.low.u32 %v86
  %v88 = vextract.high.u32 %v86
  %v89 = vmul.u32 %v82, %v73
  %v90 = vadd.s32 %v85, %v87
  %vm91 = vc.u32 %v85, %v87
  %v92 = vadd.s32 %v88, 1
  %v93 = vsel %vm91, %v92, %v88
  %v94 = vadd.s32 %v89, %v93
  %v95 = vadd.s32 %v94, 536870912
  %v96 = vshrl.u32 %v95, 30
  %v97 = vshll.u32 %v96, 30
  %v98 = vsub.s32 %v94, %v97
  %vm99 = vcmp.lt.s32.totalorder %v98, 0
  %v100 = vsub.s32 0, %v98
  %v101 = vsel %vm99, %v100, %v98
  %v102 = vclz %v101
  %v103 = vsub.s32 %v102, 2
  %vm104 = vcmp.gt.s32.totalorder 0, %v103
  %v105 = vsel %vm104, 0, %v103
  %v106 = vsub.s32 32, %v105
  %v107 = vshll.u32 %v98, %v105
  %v108 = vshrl.u32 %v90, %v106
  %v109 = vor.u32 %v107, %v108
  %v110 = vsub.s32 4294967266, %v105
  %v111 = vadd.s32 %v110, 127
  %v112 = vshll.u32 %v111, 23
  %v113 = vor.u32 4788187, %v112
  %v114 = vand.u32 2147483647, %v113
  %v116 = vcvt.s32.f32 %v109
  %v117 = vmul.f32 %v116, %v114
  %v118 = vxor.u32 %v117, 2147483648
  %v119 = vsel %vm36, %v118, %v117
  %v120 = vsub.s32 4, %v96
  %v121 = vsel %vm36, %v120, %v96
  %v122 = vsel %vm35, %v32, %v119
  %v123 = vsel %vm35, 0, %v121
  %v124 = vcosq.f32.pop %v122
  %v125 = vsinq.f32.pop %v122
  %vm126 = vweird.f32 %v32
  %v127 = vadd.s32 %v123, 3
  %v128 = vand.u32 %v127, 3
  %vm129 = vcmp.lt.s32.totalorder %v128, 2
  %vm130 = vcmp.eq.s32.totalorder %v128, 0
  %v131 = vxor.u32 %v125, 2147483648
  %v132 = vsel %vm130, %v124, %v131
  %vm133 = vcmp.eq.s32.totalorder %v128, 2
  %v134 = vxor.u32 %v124, 2147483648
  %v135 = vsel %vm133, %v134, %v125
  %v136 = vsel %vm129, %v132, %v135
  %v137 = vsel %vm126, nan, %v136
  %v138 = vand.u32 2147483647, %v33
  %vm139 = vcmp.le.f32.partialorder %v138, 0.7853982
  %vm140 = vcmp.lt.s32.totalorder %v33, 0
  %v141 = vand.u32 %v33, 2139095040
  %v142 = vshrl.u32 %v141, 23
  %v143 = vsub.s32 %v142, 127
  %v144 = vand.u32 2147483647, %v33
  %v145 = vand.u32 %v144, 8388607
  %v146 = vor.u32 %v145, 8388608
  %v147 = vsub.s32 0, %v146
  %v148 = vadd.s32 %v143, 1
  %vm149 = vcmp.gt.s32.totalorder %v148, 0
  %v150 = vsel %vm149, %v148, 0
  %v151 = vshrl.u32 %v150, 5
  %v152 = vand.u32 %v150, 31
  %v153 = vsub.s32 32, %v152
  %v154 = vshrl.u32 683565275, %v153
  %v155 = vshll.u32 683565275, %v152
  %v156 = vshrl.u32 2475754826, %v153
  %v157 = vor.u32 %v155, %v156
  %v158 = vshll.u32 2475754826, %v152
  %v159 = vshrl.u32 2131351028, %v153
  %v160 = vor.u32 %v158, %v159
  %v161 = vshll.u32 2131351028, %v152
  %v162 = vshrl.u32 2102212464, %v153
  %v163 = vor.u32 %v161, %v162
  %v164 = vshll.u32 2102212464, %v152
  %v165 = vshrl.u32 920167782, %v153
  %v166 = vor.u32 %v164, %v165
  %v167 = vshll.u32 920167782, %v152
  %v168 = vshrl.u32 1326507024, %v153
  %v169 = vor.u32 %v167, %v168
  %vm170 = vcmp.lt.s32.totalorder %v151, 1
  %vm171 = vcmp.lt.s32.totalorder %v151, 2
  %vm172 = vcmp.lt.s32.totalorder %v151, 3
  %vm173 = vcmp.lt.s32.totalorder %v151, 4
  %v174 = vsel %vm170, %v154, %v157
  %v175 = vsel %vm173, %v163, 2102212464
  %v176 = vsel %vm172, %v160, %v175
  %v177 = vsel %vm171, %v174, %v176
  %v178 = vsel %vm170, %v157, %v160
  %v179 = vsel %vm173, %v166, 920167782
  %v180 = vsel %vm172, %v163, %v179
  %v181 = vsel %vm171, %v178, %v180
  %v182 = vsel %vm170, %v160, %v163
  %v183 = vsel %vm173, %v169, 1326507024
  %v184 = vsel %vm172, %v166, %v183
  %v185 = vsel %vm171, %v182, %v184
  %v186 = vshll.u32 %v146, 8
  %v187 = vmul.u32.u64.compose %v186, %v185
  %v188 = vextract.low.u32 %v187
  %v189 = vextract.high.u32 %v187
  %v190 = vmul.u32.u64.compose %v186, %v181
  %v191 = vextract.low.u32 %v190
  %v192 = vextract.high.u32 %v190
  %v193 = vmul.u32 %v186, %v177
  %v194 = vadd.s32 %v189, %v191
  %vm195 = vc.u32 %v189, %v191
  %v196 = vadd.s32 %v192, 1
  %v197 = vsel %vm195, %v196, %v192
  %v198 = vadd.s32 %v193, %v197
  %v199 = vadd.s32 %v198, 536870912
  %v200 = vshrl.u32 %v199, 30
  %v201 = vshll.u32 %v200, 30
  %v202 = vsub.s32 %v198, %v201
  %vm203 = vcmp.lt.s32.totalorder %v202, 0
  %v204 = vsub.s32 0, %v202
  %v205 = vsel %vm203, %v204, %v202
  %v206 = vclz %v205
  %v207 = vsub.s32 %v206, 2
  %vm208 = vcmp.gt.s32.totalorder 0, %v207
  %v209 = vsel %vm208, 0, %v207
  %v210 = vsub.s32 32, %v209
  %v211 = vshll.u32 %v202, %v209
  %v212 = vshrl.u32 %v194, %v210
  %v213 = vor.u32 %v211, %v212
  %v214 = vsub.s32 4294967266, %v209
  %v215 = vadd.s32 %v214, 127
  %v216 = vshll.u32 %v215, 23
  %v217 = vor.u32 4788187, %v216
  %v218 = vand.u32 2147483647, %v217
  %v220 = vcvt.s32.f32 %v213
  %v221 = vmul.f32 %v220, %v218
  %v222 = vxor.u32 %v221, 2147483648
  %v223 = vsel %vm140, %v222, %v221
  %v224 = vsub.s32 4, %v200
  %v225 = vsel %vm140, %v224, %v200
  %v226 = vsel %vm139, %v33, %v223
  %v227 = vsel %vm139, 0, %v225
  %v228 = vcosq.f32.pop %v226
  %v229 = vsinq.f32.pop %v226
  %vm230 = vweird.f32 %v33
  %v231 = vadd.s32 %v227, 3
  %v232 = vand.u32 %v231, 3
  %vm233 = vcmp.lt.s32.totalorder %v232, 2
  %vm234 = vcmp.eq.s32.totalorder %v232, 0
  %v235 = vxor.u32 %v229, 2147483648
  %v236 = vsel %vm234, %v228, %v235
  %vm237 = vcmp.eq.s32.totalorder %v232, 2
  %v238 = vxor.u32 %v228, 2147483648
  %v239 = vsel %vm237, %v238, %v229
  %v240 = vsel %vm233, %v236, %v239
  %v241 = vsel %vm230, nan, %v240
  %v242 = vlaneseq
  %v243 = vshrl.u32 %v242, 7
  %v244 = vsub.s32 1, %v243
  %v245 = vrot.slane %v16, %v244
  %v246 = vmul.f32 %v21, %v245
  %v247 = vmul.f32 %v26, %v245
  %v248 = vand.u32 2147483647, %v246
  %vm249 = vcmp.le.f32.partialorder %v248, 0.7853982
  %vm250 = vcmp.lt.s32.totalorder %v246, 0
  %v251 = vand.u32 %v246, 2139095040
  %v252 = vshrl.u32 %v251, 23
  %v253 = vsub.s32 %v252, 127
  %v254 = vand.u32 2147483647, %v246
  %v255 = vand.u32 %v254, 8388607
  %v256 = vor.u32 %v255, 8388608
  %v257 = vsub.s32 0, %v256
  %v258 = vadd.s32 %v253, 1
  %vm259 = vcmp.gt.s32.totalorder %v258, 0
  %v260 = vsel %vm259, %v258, 0
  %v261 = vshrl.u32 %v260, 5
  %v262 = vand.u32 %v260, 31
  %v263 = vsub.s32 32, %v262
  %v264 = vshrl.u32 683565275, %v263
  %v265 = vshll.u32 683565275, %v262
  %v266 = vshrl.u32 2475754826, %v263
  %v267 = vor.u32 %v265, %v266
  %v268 = vshll.u32 2475754826, %v262
  %v269 = vshrl.u32 2131351028, %v263
  %v270 = vor.u32 %v268, %v269
  %v271 = vshll.u32 2131351028, %v262
  %v272 = vshrl.u32 2102212464, %v263
  %v273 = vor.u32 %v271, %v272
  %v274 = vshll.u32 2102212464, %v262
  %v275 = vshrl.u32 920167782, %v263
  %v276 = vor.u32 %v274, %v275
  %v277 = vshll.u32 920167782, %v262
  %v278 = vshrl.u32 1326507024, %v263
  %v279 = vor.u32 %v277, %v278
  %vm280 = vcmp.lt.s32.totalorder %v261, 1
  %vm281 = vcmp.lt.s32.totalorder %v261, 2
  %vm282 = vcmp.lt.s32.totalorder %v261, 3
  %vm283 = vcmp.lt.s32.totalorder %v261, 4
  %v284 = vsel %vm280, %v264, %v267
  %v285 = vsel %vm283, %v273, 2102212464
  %v286 = vsel %vm282, %v270, %v285
  %v287 = vsel %vm281, %v284, %v286
  %v288 = vsel %vm280, %v267, %v270
  %v289 = vsel %vm283, %v276, 920167782
  %v290 = vsel %vm282, %v273, %v289
  %v291 = vsel %vm281, %v288, %v290
  %v292 = vsel %vm280, %v270, %v273
  %v293 = vsel %vm283, %v279, 1326507024
  %v294 = vsel %vm282, %v276, %v293
  %v295 = vsel %vm281, %v292, %v294
  %v296 = vshll.u32 %v256, 8
  %v297 = vmul.u32.u64.compose %v296, %v295
  %v298 = vextract.low.u32 %v297
  %v299 = vextract.high.u32 %v297
  %v300 = vmul.u32.u64.compose %v296, %v291
  %v301 = vextract.low.u32 %v300
  %v302 = vextract.high.u32 %v300
  %v303 = vmul.u32 %v296, %v287
  %v304 = vadd.s32 %v299, %v301
  %vm305 = vc.u32 %v299, %v301
  %v306 = vadd.s32 %v302, 1
  %v307 = vsel %vm305, %v306, %v302
  %v308 = vadd.s32 %v303, %v307
  %v309 = vadd.s32 %v308, 536870912
  %v310 = vshrl.u32 %v309, 30
  %v311 = vshll.u32 %v310, 30
  %v312 = vsub.s32 %v308, %v311
  %vm313 = vcmp.lt.s32.totalorder %v312, 0
  %v314 = vsub.s32 0, %v312
  %v315 = vsel %vm313, %v314, %v312
  %v316 = vclz %v315
  %v317 = vsub.s32 %v316, 2
  %vm318 = vcmp.gt.s32.totalorder 0, %v317
  %v319 = vsel %vm318, 0, %v317
  %v320 = vsub.s32 32, %v319
  %v321 = vshll.u32 %v312, %v319
  %v322 = vshrl.u32 %v304, %v320
  %v323 = vor.u32 %v321, %v322
  %v324 = vsub.s32 4294967266, %v319
  %v325 = vadd.s32 %v324, 127
  %v326 = vshll.u32 %v325, 23
  %v327 = vor.u32 4788187, %v326
  %v328 = vand.u32 2147483647, %v327
  %v330 = vcvt.s32.f32 %v323
  %v331 = vmul.f32 %v330, %v328
  %v332 = vxor.u32 %v331, 2147483648
  %v333 = vsel %vm250, %v332, %v331
  %v334 = vsub.s32 4, %v310
  %v335 = vsel %vm250, %v334, %v310
  %v336 = vsel %vm249, %v246, %v333
  %v337 = vsel %vm249, 0, %v335
  %v338 = vcosq.f32.pop %v336
  %v339 = vsinq.f32.pop %v336
  %vm340 = vweird.f32 %v246
  %v341 = vand.u32 %v337, 3
  %vm342 = vcmp.lt.s32.totalorder %v341, 2
  %vm343 = vcmp.eq.s32.totalorder %v341, 0
  %v344 = vxor.u32 %v339, 2147483648
  %v345 = vsel %vm343, %v338, %v344
  %vm346 = vcmp.eq.s32.totalorder %v341, 2
  %v347 = vxor.u32 %v338, 2147483648
  %v348 = vsel %vm346, %v347, %v339
  %v349 = vsel %vm342, %v345, %v348
  %v350 = vsel %vm340, nan, %v349
  %v351 = vand.u32 2147483647, %v247
  %vm352 = vcmp.le.f32.partialorder %v351, 0.7853982
  %vm353 = vcmp.lt.s32.totalorder %v247, 0
  %v354 = vand.u32 %v247, 2139095040
  %v355 = vshrl.u32 %v354, 23
  %v356 = vsub.s32 %v355, 127
  %v357 = vand.u32 2147483647, %v247
  %v358 = vand.u32 %v357, 8388607
  %v359 = vor.u32 %v358, 8388608
  %v360 = vsub.s32 0, %v359
  %v361 = vadd.s32 %v356, 1
  %vm362 = vcmp.gt.s32.totalorder %v361, 0
  %v363 = vsel %vm362, %v361, 0
  %v364 = vshrl.u32 %v363, 5
  %v365 = vand.u32 %v363, 31
  %v366 = vsub.s32 32, %v365
  %v367 = vshrl.u32 683565275, %v366
  %v368 = vshll.u32 683565275, %v365
  %v369 = vshrl.u32 2475754826, %v366
  %v370 = vor.u32 %v368, %v369
  %v371 = vshll.u32 2475754826, %v365
  %v372 = vshrl.u32 2131351028, %v366
  %v373 = vor.u32 %v371, %v372
  %v374 = vshll.u32 2131351028, %v365
  %v375 = vshrl.u32 2102212464, %v366
  %v376 = vor.u32 %v374, %v375
  %v377 = vshll.u32 2102212464, %v365
  %v378 = vshrl.u32 920167782, %v366
  %v379 = vor.u32 %v377, %v378
  %v380 = vshll.u32 920167782, %v365
  %v381 = vshrl.u32 1326507024, %v366
  %v382 = vor.u32 %v380, %v381
  %vm383 = vcmp.lt.s32.totalorder %v364, 1
  %vm384 = vcmp.lt.s32.totalorder %v364, 2
  %vm385 = vcmp.lt.s32.totalorder %v364, 3
  %vm386 = vcmp.lt.s32.totalorder %v364, 4
  %v387 = vsel %vm383, %v367, %v370
  %v388 = vsel %vm386, %v376, 2102212464
  %v389 = vsel %vm385, %v373, %v388
  %v390 = vsel %vm384, %v387, %v389
  %v391 = vsel %vm383, %v370, %v373
  %v392 = vsel %vm386, %v379, 920167782
  %v393 = vsel %vm385, %v376, %v392
  %v394 = vsel %vm384, %v391, %v393
  %v395 = vsel %vm383, %v373, %v376
  %v396 = vsel %vm386, %v382, 1326507024
  %v397 = vsel %vm385, %v379, %v396
  %v398 = vsel %vm384, %v395, %v397
  %v399 = vshll.u32 %v359, 8
  %v400 = vmul.u32.u64.compose %v399, %v398
  %v401 = vextract.low.u32 %v400
  %v402 = vextract.high.u32 %v400
  %v403 = vmul.u32.u64.compose %v399, %v394
  %v404 = vextract.low.u32 %v403
  %v405 = vextract.high.u32 %v403
  %v406 = vmul.u32 %v399, %v390
  %v407 = vadd.s32 %v402, %v404
  %vm408 = vc.u32 %v402, %v404
  %v409 = vadd.s32 %v405, 1
  %v410 = vsel %vm408, %v409, %v405
  %v411 = vadd.s32 %v406, %v410
  %v412 = vadd.s32 %v411, 536870912
  %v413 = vshrl.u32 %v412, 30
  %v414 = vshll.u32 %v413, 30
  %v415 = vsub.s32 %v411, %v414
  %vm416 = vcmp.lt.s32.totalorder %v415, 0
  %v417 = vsub.s32 0, %v415
  %v418 = vsel %vm416, %v417, %v415
  %v419 = vclz %v418
  %v420 = vsub.s32 %v419, 2
  %vm421 = vcmp.gt.s32.totalorder 0, %v420
  %v422 = vsel %vm421, 0, %v420
  %v423 = vsub.s32 32, %v422
  %v424 = vshll.u32 %v415, %v422
  %v425 = vshrl.u32 %v407, %v423
  %v426 = vor.u32 %v424, %v425
  %v427 = vsub.s32 4294967266, %v422
  %v428 = vadd.s32 %v427, 127
  %v429 = vshll.u32 %v428, 23
  %v430 = vor.u32 4788187, %v429
  %v431 = vand.u32 2147483647, %v430
  %v433 = vcvt.s32.f32 %v426
  %v434 = vmul.f32 %v433, %v431
  %v435 = vxor.u32 %v434, 2147483648
  %v436 = vsel %vm353, %v435, %v434
  %v437 = vsub.s32 4, %v413
  %v438 = vsel %vm353, %v437, %v413
  %v439 = vsel %vm352, %v247, %v436
  %v440 = vsel %vm352, 0, %v438
  %v441 = vcosq.f32.pop %v439
  %v442 = vsinq.f32.pop %v439
  %vm443 = vweird.f32 %v247
  %v444 = vand.u32 %v440, 3
  %vm445 = vcmp.lt.s32.totalorder %v444, 2
  %vm446 = vcmp.eq.s32.totalorder %v444, 0
  %v447 = vxor.u32 %v442, 2147483648
  %v448 = vsel %vm446, %v441, %v447
  %vm449 = vcmp.eq.s32.totalorder %v444, 2
  %v450 = vxor.u32 %v441, 2147483648
  %v451 = vsel %vm449, %v450, %v442
  %v452 = vsel %vm445, %v448, %v451
  %v453 = vsel %vm443, nan, %v452
  %v454 = vld [vmem:[%s1] sm:$0xff]
  %v455 = vld [vmem:[%s1 + $0x8] sm:$0xff]
  %v456 = vld [vmem:[%s1 + $0x10] sm:$0xff]
  %v457 = vld [vmem:[%s1 + $0x18] sm:$0xff]
  %v458 = vld [vmem:[%s1 + $0x20] sm:$0xff]
  %v459 = vld [vmem:[%s1 + $0x28] sm:$0xff]
  %v460 = vld [vmem:[%s1 + $0x30] sm:$0xff]
  %v461 = vld [vmem:[%s1 + $0x38] sm:$0xff]
  %v462 = vld [vmem:[%s1 + $0x40] sm:$0xff]
  %v463 = vld [vmem:[%s1 + $0x48] sm:$0xff]
  %v464 = vld [vmem:[%s1 + $0x50] sm:$0xff]
  %v465 = vld [vmem:[%s1 + $0x58] sm:$0xff]
  %v466 = vld [vmem:[%s1 + $0x60] sm:$0xff]
  %v467 = vld [vmem:[%s1 + $0x68] sm:$0xff]
  %v468 = vld [vmem:[%s1 + $0x70] sm:$0xff]
  %v469 = vld [vmem:[%s1 + $0x78] sm:$0xff]
  %vm470 = vcmask 261120
  %v472 = vsel %vm470, %v350, 0
  %v475 = vsel %vm470, %v453, 0
  %477 = vmatprep.subr.mxu0 0.0
  %478 = vmatpush1.msra.mxu0 %v458
  %479 = vmatprep.subr.mxu0 0.0
  %480 = vmatpush1.msra.mxu0 %v459
  %481 = vmatprep.subr.mxu0 0.0
  %482 = vmatpush1.msra.mxu0 %v460
  %483 = vmatprep.subr.mxu0 0.0
  %484 = vmatpush1.msra.mxu0 %v461
  %485 = vmatprep.subr.mxu0 0.0
  %486 = vmatpush1.msra.mxu0 0.0
  %487 = vmatprep.subr.mxu0 0.0
  %488 = vmatpush1.msra.mxu0 0.0
  %489 = vmatprep.subr.mxu0 0.0
  %490 = vmatpush1.msra.mxu0 0.0
  %491 = vmatprep.subr.mxu0 0.0
  %492 = vmatpush1.msra.mxu0 0.0
  %493 = vmatprep.subr.mxu0 0.0
  %494 = vmatpush1.msra.mxu0 0.0
  %495 = vmatprep.subr.mxu0 0.0
  %496 = vmatpush1.msra.mxu0 0.0
  %497 = vmatprep.subr.mxu0 0.0
  %498 = vmatpush1.msra.mxu0 0.0
  %499 = vmatprep.subr.mxu0 0.0
  %500 = vmatpush1.msra.mxu0 0.0
  %501 = vmatprep.subr.mxu0 0.0
  %502 = vmatpush1.msra.mxu0 0.0
  %503 = vmatprep.subr.mxu0 0.0
  %504 = vmatpush1.msra.mxu0 0.0
  %505 = vmatprep.subr.mxu0 0.0
  %506 = vmatpush1.msra.mxu0 0.0
  %507 = vmatprep.subr.mxu0 0.0
  %508 = vmatpush1.msra.mxu0 0.0
  %509 = vmatprep.subr.mxu0 0.0
  %510 = vmatpush1.msra.mxu0 0.0
  %511 = vmatprep.subr.mxu0 0.0
  %512 = vmatpush1.msra.mxu0 0.0
  %513 = vmatprep.subr.mxu0 0.0
  %514 = vmatpush1.msra.mxu0 0.0
  %515 = vmatprep.subr.mxu0 0.0
  %516 = vmatpush1.msra.mxu0 0.0
  %517 = vmatprep.subr.mxu0 0.0
  %518 = vmatpush1.msra.mxu0 0.0
  %519 = vmatprep.subr.mxu0 0.0
  %520 = vmatpush1.msra.mxu0 0.0
  %521 = vmatprep.subr.mxu0 0.0
  %522 = vmatpush1.msra.mxu0 0.0
  %523 = vmatprep.subr.mxu0 0.0
  %524 = vmatpush1.msra.mxu0 0.0
  %525 = vmatprep.subr.mxu0 0.0
  %526 = vmatpush1.msra.mxu0 0.0
  %527 = vmatprep.subr.mxu0 0.0
  %528 = vmatpush1.msra.mxu0 0.0
  %529 = vmatprep.subr.mxu0 0.0
  %530 = vmatpush1.msra.mxu0 0.0
  %531 = vmatprep.subr.mxu0 0.0
  %532 = vmatpush1.msra.mxu0 0.0
  %533 = vmatprep.subr.mxu0 0.0
  %534 = vmatpush1.msra.mxu0 0.0
  %535 = vmatprep.subr.mxu0 0.0
  %536 = vmatpush1.msra.mxu0 0.0
  %537 = vmatprep.subr.mxu0 0.0
  %538 = vmatpush1.msra.mxu0 0.0
  %539 = vmatprep.subr.mxu0 0.0
  %540 = vmatpush1.msra.mxu0 0.0
  %541 = vmatprep.mubr.f32.mxu0 0.0
  %542 = vmatmul.mubr.f32.gmra.mrb[0].mxu0 %v472
  %v543 = vpop.f32.mrb[0].mxu0
  %v544 = vadd.f32 0.0, %v543
  %v545 = vpop.f32.mrb[0].mxu0
  %546 = vmatprep.mubr.f32.mxu0 0.0
  %547 = vmatmul.mubr.f32.gmra.mrb[0].mxu0 %v475
  %v548 = vpop.f32.mrb[0].mxu0
  %v549 = vadd.f32 0.0, %v548
  %v550 = vpop.f32.mrb[0].mxu0
  %551 = vdwg.mxu0
  %v553 = vsel %vm470, %v137, 0
  %v556 = vsel %vm470, %v241, 0
  %558 = vmatprep.subr.mxu0 0.0
  %559 = vmatpush1.msra.mxu0 %v454
  %560 = vmatprep.subr.mxu0 0.0
  %561 = vmatpush1.msra.mxu0 %v455
  %562 = vmatprep.subr.mxu0 0.0
  %563 = vmatpush1.msra.mxu0 %v456
  %564 = vmatprep.subr.mxu0 0.0
  %565 = vmatpush1.msra.mxu0 %v457
  %566 = vmatprep.subr.mxu0 0.0
  %567 = vmatpush1.msra.mxu0 0.0
  %568 = vmatprep.subr.mxu0 0.0
  %569 = vmatpush1.msra.mxu0 0.0
  %570 = vmatprep.subr.mxu0 0.0
  %571 = vmatpush1.msra.mxu0 0.0
  %572 = vmatprep.subr.mxu0 0.0
  %573 = vmatpush1.msra.mxu0 0.0
  %574 = vmatprep.subr.mxu0 0.0
  %575 = vmatpush1.msra.mxu0 0.0
  %576 = vmatprep.subr.mxu0 0.0
  %577 = vmatpush1.msra.mxu0 0.0
  %578 = vmatprep.subr.mxu0 0.0
  %579 = vmatpush1.msra.mxu0 0.0
  %580 = vmatprep.subr.mxu0 0.0
  %581 = vmatpush1.msra.mxu0 0.0
  %582 = vmatprep.subr.mxu0 0.0
  %583 = vmatpush1.msra.mxu0 0.0
  %584 = vmatprep.subr.mxu0 0.0
  %585 = vmatpush1.msra.mxu0 0.0
  %586 = vmatprep.subr.mxu0 0.0
  %587 = vmatpush1.msra.mxu0 0.0
  %588 = vmatprep.subr.mxu0 0.0
  %589 = vmatpush1.msra.mxu0 0.0
  %590 = vmatprep.subr.mxu0 0.0
  %591 = vmatpush1.msra.mxu0 0.0
  %592 = vmatprep.subr.mxu0 0.0
  %593 = vmatpush1.msra.mxu0 0.0
  %594 = vmatprep.subr.mxu0 0.0
  %595 = vmatpush1.msra.mxu0 0.0
  %596 = vmatprep.subr.mxu0 0.0
  %597 = vmatpush1.msra.mxu0 0.0
  %598 = vmatprep.subr.mxu0 0.0
  %599 = vmatpush1.msra.mxu0 0.0
  %600 = vmatprep.subr.mxu0 0.0
  %601 = vmatpush1.msra.mxu0 0.0
  %602 = vmatprep.subr.mxu0 0.0
  %603 = vmatpush1.msra.mxu0 0.0
  %604 = vmatprep.subr.mxu0 0.0
  %605 = vmatpush1.msra.mxu0 0.0
  %606 = vmatprep.subr.mxu0 0.0
  %607 = vmatpush1.msra.mxu0 0.0
  %608 = vmatprep.subr.mxu0 0.0
  %609 = vmatpush1.msra.mxu0 0.0
  %610 = vmatprep.subr.mxu0 0.0
  %611 = vmatpush1.msra.mxu0 0.0
  %612 = vmatprep.subr.mxu0 0.0
  %613 = vmatpush1.msra.mxu0 0.0
  %614 = vmatprep.subr.mxu0 0.0
  %615 = vmatpush1.msra.mxu0 0.0
  %616 = vmatprep.subr.mxu0 0.0
  %617 = vmatpush1.msra.mxu0 0.0
  %618 = vmatprep.subr.mxu0 0.0
  %619 = vmatpush1.msra.mxu0 0.0
  %620 = vmatprep.subr.mxu0 0.0
  %621 = vmatpush1.msra.mxu0 0.0
  %622 = vmatprep.mubr.f32.mxu0 0.0
  %623 = vmatmul.mubr.f32.gmra.mrb[0].mxu0 %v553
  %v624 = vpop.f32.mrb[0].mxu0
  %v625 = vadd.f32 %v544, %v624
  %v626 = vpop.f32.mrb[0].mxu0
  %627 = vmatprep.mubr.f32.mxu0 0.0
  %628 = vmatmul.mubr.f32.gmra.mrb[0].mxu0 %v556
  %v629 = vpop.f32.mrb[0].mxu0
  %v630 = vadd.f32 %v549, %v629
  %v631 = vpop.f32.mrb[0].mxu0
  %632 = vdwg.mxu0
  %v633 = vlaneseq
  %v634 = vshrl.u32 %v633, 7
  %v635 = vsub.s32 2, %v634
  %v636 = vrot.slane %v16, %v635
  %v637 = vadd.f32 %v625, %v636
  %v638 = vadd.f32 %v630, %v636
  %v639 = vtanh.pop %v637
  %v640 = vtanh.pop %v638
  %v641 = vlaneseq
  %v642 = vshrl.u32 %v641, 7
  %v643 = vsub.s32 3, %v642
  %v644 = vrot.slane %v16, %v643
  %v646 = vsel %vm470, %v639, 0
  %v649 = vsel %vm470, %v640, 0
  %651 = vmatprep.subr.mxu0 0.0
  %652 = vmatpush1.msra.mxu0 %v462
  %653 = vmatprep.subr.mxu0 0.0
  %654 = vmatpush1.msra.mxu0 %v463
  %655 = vmatprep.subr.mxu0 0.0
  %656 = vmatpush1.msra.mxu0 %v464
  %657 = vmatprep.subr.mxu0 0.0
  %658 = vmatpush1.msra.mxu0 %v465
  %659 = vmatprep.subr.mxu0 0.0
  %660 = vmatpush1.msra.mxu0 0.0
  %661 = vmatprep.subr.mxu0 0.0
  %662 = vmatpush1.msra.mxu0 0.0
  %663 = vmatprep.subr.mxu0 0.0
  %664 = vmatpush1.msra.mxu0 0.0
  %665 = vmatprep.subr.mxu0 0.0
  %666 = vmatpush1.msra.mxu0 0.0
  %667 = vmatprep.subr.mxu0 0.0
  %668 = vmatpush1.msra.mxu0 0.0
  %669 = vmatprep.subr.mxu0 0.0
  %670 = vmatpush1.msra.mxu0 0.0
  %671 = vmatprep.subr.mxu0 0.0
  %672 = vmatpush1.msra.mxu0 0.0
  %673 = vmatprep.subr.mxu0 0.0
  %674 = vmatpush1.msra.mxu0 0.0
  %675 = vmatprep.subr.mxu0 0.0
  %676 = vmatpush1.msra.mxu0 0.0
  %677 = vmatprep.subr.mxu0 0.0
  %678 = vmatpush1.msra.mxu0 0.0
  %679 = vmatprep.subr.mxu0 0.0
  %680 = vmatpush1.msra.mxu0 0.0
  %681 = vmatprep.subr.mxu0 0.0
  %682 = vmatpush1.msra.mxu0 0.0
  %683 = vmatprep.subr.mxu0 0.0
  %684 = vmatpush1.msra.mxu0 0.0
  %685 = vmatprep.subr.mxu0 0.0
  %686 = vmatpush1.msra.mxu0 0.0
  %687 = vmatprep.subr.mxu0 0.0
  %688 = vmatpush1.msra.mxu0 0.0
  %689 = vmatprep.subr.mxu0 0.0
  %690 = vmatpush1.msra.mxu0 0.0
  %691 = vmatprep.subr.mxu0 0.0
  %692 = vmatpush1.msra.mxu0 0.0
  %693 = vmatprep.subr.mxu0 0.0
  %694 = vmatpush1.msra.mxu0 0.0
  %695 = vmatprep.subr.mxu0 0.0
  %696 = vmatpush1.msra.mxu0 0.0
  %697 = vmatprep.subr.mxu0 0.0
  %698 = vmatpush1.msra.mxu0 0.0
  %699 = vmatprep.subr.mxu0 0.0
  %700 = vmatpush1.msra.mxu0 0.0
  %701 = vmatprep.subr.mxu0 0.0
  %702 = vmatpush1.msra.mxu0 0.0
  %703 = vmatprep.subr.mxu0 0.0
  %704 = vmatpush1.msra.mxu0 0.0
  %705 = vmatprep.subr.mxu0 0.0
  %706 = vmatpush1.msra.mxu0 0.0
  %707 = vmatprep.subr.mxu0 0.0
  %708 = vmatpush1.msra.mxu0 0.0
  %709 = vmatprep.subr.mxu0 0.0
  %710 = vmatpush1.msra.mxu0 0.0
  %711 = vmatprep.subr.mxu0 0.0
  %712 = vmatpush1.msra.mxu0 0.0
  %713 = vmatprep.subr.mxu0 0.0
  %714 = vmatpush1.msra.mxu0 0.0
  %715 = vmatprep.mubr.f32.mxu0 0.0
  %716 = vmatmul.mubr.f32.gmra.mrb[0].mxu0 %v646
  %v717 = vpop.f32.mrb[0].mxu0
  %v718 = vadd.f32 %v644, %v717
  %v719 = vpop.f32.mrb[0].mxu0
  %720 = vmatprep.mubr.f32.mxu0 0.0
  %721 = vmatmul.mubr.f32.gmra.mrb[0].mxu0 %v649
  %v722 = vpop.f32.mrb[0].mxu0
  %v723 = vadd.f32 %v644, %v722
  %v724 = vpop.f32.mrb[0].mxu0
  %725 = vdwg.mxu0
  %v726 = vtanh.pop %v718
  %v727 = vtanh.pop %v723
  %v728 = vlaneseq
  %v729 = vshrl.u32 %v728, 7
  %v730 = vsub.s32 4, %v729
  %v731 = vrot.slane %v16, %v730
  %v733 = vsel %vm470, %v726, 0
  %v736 = vsel %vm470, %v727, 0
  %738 = vmatprep.subr.mxu0 0.0
  %739 = vmatpush1.msra.mxu0 %v466
  %740 = vmatprep.subr.mxu0 0.0
  %741 = vmatpush1.msra.mxu0 %v467
  %742 = vmatprep.subr.mxu0 0.0
  %743 = vmatpush1.msra.mxu0 %v468
  %744 = vmatprep.subr.mxu0 0.0
  %745 = vmatpush1.msra.mxu0 %v469
  %746 = vmatprep.subr.mxu0 0.0
  %747 = vmatpush1.msra.mxu0 0.0
  %748 = vmatprep.subr.mxu0 0.0
  %749 = vmatpush1.msra.mxu0 0.0
  %750 = vmatprep.subr.mxu0 0.0
  %751 = vmatpush1.msra.mxu0 0.0
  %752 = vmatprep.subr.mxu0 0.0
  %753 = vmatpush1.msra.mxu0 0.0
  %754 = vmatprep.subr.mxu0 0.0
  %755 = vmatpush1.msra.mxu0 0.0
  %756 = vmatprep.subr.mxu0 0.0
  %757 = vmatpush1.msra.mxu0 0.0
  %758 = vmatprep.subr.mxu0 0.0
  %759 = vmatpush1.msra.mxu0 0.0
  %760 = vmatprep.subr.mxu0 0.0
  %761 = vmatpush1.msra.mxu0 0.0
  %762 = vmatprep.subr.mxu0 0.0
  %763 = vmatpush1.msra.mxu0 0.0
  %764 = vmatprep.subr.mxu0 0.0
  %765 = vmatpush1.msra.mxu0 0.0
  %766 = vmatprep.subr.mxu0 0.0
  %767 = vmatpush1.msra.mxu0 0.0
  %768 = vmatprep.subr.mxu0 0.0
  %769 = vmatpush1.msra.mxu0 0.0
  %770 = vmatprep.subr.mxu0 0.0
  %771 = vmatpush1.msra.mxu0 0.0
  %772 = vmatprep.subr.mxu0 0.0
  %773 = vmatpush1.msra.mxu0 0.0
  %774 = vmatprep.subr.mxu0 0.0
  %775 = vmatpush1.msra.mxu0 0.0
  %776 = vmatprep.subr.mxu0 0.0
  %777 = vmatpush1.msra.mxu0 0.0
  %778 = vmatprep.subr.mxu0 0.0
  %779 = vmatpush1.msra.mxu0 0.0
  %780 = vmatprep.subr.mxu0 0.0
  %781 = vmatpush1.msra.mxu0 0.0
  %782 = vmatprep.subr.mxu0 0.0
  %783 = vmatpush1.msra.mxu0 0.0
  %784 = vmatprep.subr.mxu0 0.0
  %785 = vmatpush1.msra.mxu0 0.0
  %786 = vmatprep.subr.mxu0 0.0
  %787 = vmatpush1.msra.mxu0 0.0
  %788 = vmatprep.subr.mxu0 0.0
  %789 = vmatpush1.msra.mxu0 0.0
  %790 = vmatprep.subr.mxu0 0.0
  %791 = vmatpush1.msra.mxu0 0.0
  %792 = vmatprep.subr.mxu0 0.0
  %793 = vmatpush1.msra.mxu0 0.0
  %794 = vmatprep.subr.mxu0 0.0
  %795 = vmatpush1.msra.mxu0 0.0
  %796 = vmatprep.subr.mxu0 0.0
  %797 = vmatpush1.msra.mxu0 0.0
  %798 = vmatprep.subr.mxu0 0.0
  %799 = vmatpush1.msra.mxu0 0.0
  %800 = vmatprep.subr.mxu0 0.0
  %801 = vmatpush1.msra.mxu0 0.0
  %802 = vmatprep.mubr.f32.mxu0 0.0
  %803 = vmatmul.mubr.f32.gmra.mrb[0].mxu0 %v733
  %v804 = vpop.f32.mrb[0].mxu0
  %v805 = vadd.f32 %v731, %v804
  %v806 = vpop.f32.mrb[0].mxu0
  %807 = vmatprep.mubr.f32.mxu0 0.0
  %808 = vmatmul.mubr.f32.gmra.mrb[0].mxu0 %v736
  %v809 = vpop.f32.mrb[0].mxu0
  %v810 = vadd.f32 %v731, %v809
  %v811 = vpop.f32.mrb[0].mxu0
  %812 = vdwg.mxu0
  %v813 = vtanh.pop %v805
  %v814 = vtanh.pop %v810
  %v815 = vlaneseq
  %v816 = vshrl.u32 %v815, 7
  %v817 = vsub.s32 5, %v816
  %v818 = vrot.slane %v16, %v817
  %v819 = vmul.f32 %v813, %v818
  %v820 = vmul.f32 %v814, %v818
  %v821 = vsel %vm470, %v819, 0.0
  %822 = vadd.xlane.f32.xlu0 %v821
  %v823 = vpop.xlane.xlu0 %822
  %v824 = vsel %vm470, %v820, 0.0
  %825 = vadd.xlane.f32.xlu0 %v824
  %v826 = vpop.xlane.xlu0 %825
  %v827 = vlaneseq
  %v828 = vshrl.u32 %v827, 7
  %v829 = vsub.s32 6, %v828
  %v830 = vrot.slane %v16, %v829
  %v831 = vmul.f32 %v813, %v830
  %v832 = vmul.f32 %v814, %v830
  %v833 = vsel %vm470, %v831, 0.0
  %834 = vadd.xlane.f32.xlu0 %v833
  %v835 = vpop.xlane.xlu0 %834
  %v836 = vsel %vm470, %v832, 0.0
  %837 = vadd.xlane.f32.xlu0 %v836
  %v838 = vpop.xlane.xlu0 %837
  %v839 = vlaneseq
  %v840 = vand.u32 %v839, 127
  %vm841 = vcmp.eq.s32.totalorder %v840, 0
  %v842 = vsel %vm841, %v823, %v835
  %v843 = vsel %vm841, %v826, %v838
  %v844 = vlaneseq
  %v845 = vshrl.u32 %v844, 7
  %v846 = vsub.s32 7, %v845
  %v847 = vrot.slane %v16, %v846
  %v848 = vadd.f32 %v842, %v847
  %v849 = vadd.f32 %v843, %v847
  %v850 = vtanh.pop %v14
  %v851 = vtanh.pop %v15
  %853 = vset.pattern.permute.xlu0 0
  %854 = vperm.xlu0 %853, %v850
  %v855 = vpop.permute.xlu0 %854
  %858 = vset.pattern.permute.xlu0 0
  %859 = vperm.xlu0 %858, %v851
  %v860 = vpop.permute.xlu0 %859
  %v862 = vmul.f32 %v855, %v848
  %v863 = vmul.f32 %v860, %v849
  %v864 = vlaneseq
  %v865 = vshrl.u32 %v864, 7
  %v866 = vsub.s32 0, %v865
  %v867 = vrot.slane %v17, %v866
  %v868 = vadd.f32 %v867, %v862
  %v869 = vadd.f32 %v867, %v863
  %vm870 = vcmask 15360
  %871 = vst.msk [vmem:[%s3] sm:$0xff] %vm870, %v868
  %872 = vst.msk [vmem:[%s3 + $0x8] sm:$0xff] %vm870, %v869
  // Predicated region
  $region14: #{tpu_custom_call.1} parent=0 // pred_check
    _
  $region15: #{tpu_custom_call.1} parent=0 // pred_check_branch
    %874 = sbr.rel (0) target = $region17
  $region16: #{tpu_custom_call.1} parent=0 // pred_region
    _
  $region17: #{tpu_custom_call.1} parent=0 // pred_fallthru
    _
  // Predicated region
  $region18: #{tpu_custom_call.1} parent=0 // pred_check
    _
  $region19: #{tpu_custom_call.1} parent=0 // pred_check_branch
    %876 = sbr.rel (0) target = $region21
  $region20: #{tpu_custom_call.1} parent=0 // pred_region
    _
  $region21: #{tpu_custom_call.1} parent=0 // pred_fallthru
    _

</llo_original>
